<compile_context>
chip_gen: v5e
topology: v5e:2x2
jax: 0.10.0
libtpu: 0.0.40
codegen_flags: <defaults>
</compile_context>

<pallas_src>
import functools

import jax
import jax.numpy as jnp
from jax.experimental import pallas as pl
from jax.experimental.pallas import tpu as pltpu


LANE = 128       # lane width: pad hidden / output feature dims to this
SUBLANE = 8      # sublane width: batch tiles are multiples of this
MAX_TB = 512     # batch-tile cap (mem-bound sweet spot; tiny VMEM footprint)


def _round_up(n, m):
    return ((n + m - 1) // m) * m


def _mlp_kernel(x_ref, w1_ref, b1_ref, w2_ref, b2_ref, o_ref):
    # fc1: (tb, in_dim) @ (in_dim, 128) -> f32 accumulate, bias + ReLU in f32.
    x = x_ref[...].astype(jnp.bfloat16)          # bf16 MXU operands, no extra HBM pass
    h = jnp.dot(x, w1_ref[...], preferred_element_type=jnp.float32)
    h = jnp.maximum(h + b1_ref[...], 0.0)
    # reward head: (tb, 128) @ (128, 128) -> f32 accumulate, bias in f32.
    y = jnp.dot(h.astype(jnp.bfloat16), w2_ref[...],
                preferred_element_type=jnp.float32)
    o_ref[...] = (y + b2_ref[...]).astype(o_ref.dtype)


@functools.partial(jax.jit, static_argnames=("reward_support_size", "out_dtype"))
def fc_dynamics_reward(x, w1_p, b1_p, w2_p, b2_p, *, reward_support_size,
                       out_dtype=jnp.bfloat16):
    """Forward pass of FCDynamicsReward.

    x:    (B, 50 + action_space)               -- unpadded activations (any float dtype)
    w1_p: (in_dim, HID_P)  bf16 fc1 weight (transposed, hidden padded to 128)
    b1_p: (1, HID_P)       f32 fc1 bias (padded)
    w2_p: (HID_P, V_P)     bf16 reward weight (transposed, padded)
    b2_p: (1, V_P)         f32 reward bias (padded)
    returns (B, reward_support_size) in `out_dtype` (bf16 by default).
    """
    B, in_dim = x.shape
    hid_p = w1_p.shape[1]
    v_p = w2_p.shape[1]

    # Batch tiling: cdiv grid with a (safe) ragged last block -- no padding of
    # B to a tile multiple, so B just over a multiple no longer doubles work.
    tb = min(MAX_TB, _round_up(B, SUBLANE))
    num_tiles = pl.cdiv(B, tb)
    # Guarantee >= 2 grid steps when the batch is splittable, so the
    # "parallel" axis can use both TensorCores on v7x.
    if num_tiles == 1 and B > 2 * SUBLANE:
        tb = _round_up(pl.cdiv(B, 2), SUBLANE)
        num_tiles = pl.cdiv(B, tb)

    out_p = pl.pallas_call(
        _mlp_kernel,
        out_shape=jax.ShapeDtypeStruct((B, v_p), out_dtype),
        grid_spec=pl.GridSpec(
            grid=(num_tiles,),
            in_specs=[
                # x tile: last dim == full array dim, so 54 lanes is legal.
                pl.BlockSpec((tb, in_dim), lambda i: (i, 0)),
                # Weights / biases: constant index_map -> VMEM-resident, no re-DMA.
                pl.BlockSpec((in_dim, hid_p), lambda i: (0, 0)),   # w1 (bf16)
                pl.BlockSpec((1, hid_p), lambda i: (0, 0)),        # b1 (f32)
                pl.BlockSpec((hid_p, v_p), lambda i: (0, 0)),      # w2 (bf16)
                pl.BlockSpec((1, v_p), lambda i: (0, 0)),          # b2 (f32)
            ],
            out_specs=pl.BlockSpec((tb, v_p), lambda i: (i, 0)),
        ),
        compiler_params=pltpu.CompilerParams(
            dimension_semantics=("parallel",),  # shard batch across TCs on v7x
        ),
    )(x, w1_p, b1_p, w2_p, b2_p)

    # Lane-padded output columns are exact garbage-free zeros of the padded
    # weights; slice them off. (Downstream could also consume the padded
    # (B, 128) block directly and skip this slice.)
    return out_p[:, :reward_support_size]


def init_params(key, input_dim, action_space, reward_support_size, hidden=100):
    """PyTorch-nn.Linear-style init (U(-1/sqrt(fan_in), 1/sqrt(fan_in))).

    Returns BOTH the logical (unpadded, transposed, f32) params and the
    kernel-ready versions: bf16 weights with hidden/output dims zero-padded to
    128 lanes (padded columns stay exactly zero through bias+ReLU and are
    sliced off), f32 biases.
    """
    # Per the module definition, fc1 input dim is 50 + action_space.
    in_dim = 50 + action_space
    k1, k2, k3, k4 = jax.random.split(key, 4)
    bound1 = 1.0 / jnp.sqrt(in_dim)
    bound2 = 1.0 / jnp.sqrt(hidden)
    w1 = jax.random.uniform(k1, (in_dim, hidden), jnp.float32, -bound1, bound1)
    b1 = jax.random.uniform(k2, (1, hidden), jnp.float32, -bound1, bound1)
    w2 = jax.random.uniform(k3, (hidden, reward_support_size), jnp.float32,
                            -bound2, bound2)
    b2 = jax.random.uniform(k4, (1, reward_support_size), jnp.float32,
                            -bound2, bound2)

    hid_p = _round_up(hidden, LANE)
    v_p = _round_up(reward_support_size, LANE)

    # K (in_dim) is NOT padded -- Mosaic pads it internally for the MXU.
    w1_p = jnp.zeros((in_dim, hid_p), jnp.bfloat16).at[:, :hidden].set(
        w1.astype(jnp.bfloat16))
    b1_p = jnp.zeros((1, hid_p), jnp.float32).at[:, :hidden].set(b1)
    w2_p = jnp.zeros((hid_p, v_p), jnp.bfloat16).at[:hidden, :reward_support_size].set(
        w2.astype(jnp.bfloat16))
    b2_p = jnp.zeros((1, v_p), jnp.float32).at[:, :reward_support_size].set(b2)

    return (w1, b1, w2, b2), (w1_p, b1_p, w2_p, b2_p)


if __name__ == "__main__":
    key = jax.random.PRNGKey(0)
    kx, kp = jax.random.split(key)

    B = 8                       # batch (small demo)
    ACTION_SPACE = 4            # action one-hot width appended to the state
    IN = 50 + ACTION_SPACE      # fc1 in_features (fixed by the module)
    HIDDEN = 100                # fc1 out_features (fixed by the module)
    RS = 21                     # reward_support_size

    x = jax.random.normal(kx, (B, IN), jnp.float32)
    (w1, b1, w2, b2), padded = init_params(kp, IN, ACTION_SPACE, RS, HIDDEN)

    out = fc_dynamics_reward(x, *padded, reward_support_size=RS)
    out = jax.block_until_ready(out)

    # Reference in plain f32 JAX (same semantics as the PyTorch forward).
    # bf16 operands + bf16 output => loose tolerance (~1e-2 relative).
    ref = jnp.maximum(x @ w1 + b1, 0.0) @ w2 + b2
    assert out.shape == (B, RS), out.shape
    assert jnp.allclose(out.astype(jnp.float32), ref, atol=2e-2, rtol=2e-2)

    print("KERNEL_OK")
</pallas_src>

<mosaic_0001>
module attributes {stable_mosaic.version = 11 : i64} {
  func.func @_mlp_kernel(%arg0: i32, %arg1: memref<8x54xf32, #tpu.memory_space<vmem>>, %arg2: memref<54x128xbf16, #tpu.memory_space<vmem>>, %arg3: memref<1x128xf32, #tpu.memory_space<vmem>>, %arg4: memref<128x128xbf16, #tpu.memory_space<vmem>>, %arg5: memref<1x128xf32, #tpu.memory_space<vmem>>, %arg6: memref<8x128xbf16, #tpu.memory_space<vmem>>) attributes {dimension_semantics = [#tpu.dimension_semantics<parallel>], iteration_bounds = array<i64: 1>, scalar_prefetch = 0 : i64, scratch_operands = 0 : i64, tpu.core_type = #tpu.core_type<tc>, window_params = [{transform_indices = @transform_0, window_bounds = array<i64: 8, 54>}, {pipeline_mode = #tpu.pipeline_mode<synchronous>, transform_indices = @transform_1, window_bounds = array<i64: 54, 128>}, {pipeline_mode = #tpu.pipeline_mode<synchronous>, transform_indices = @transform_2, window_bounds = array<i64: 1, 128>}, {pipeline_mode = #tpu.pipeline_mode<synchronous>, transform_indices = @transform_3, window_bounds = array<i64: 128, 128>}, {pipeline_mode = #tpu.pipeline_mode<synchronous>, transform_indices = @transform_4, window_bounds = array<i64: 1, 128>}, {transform_indices = @transform_5, window_bounds = array<i64: 8, 128>}]} {
    %c0 = arith.constant 0 : index
    %c0_0 = arith.constant 0 : index
    %0 = vector.load %arg1[%c0, %c0_0] : memref<8x54xf32, #tpu.memory_space<vmem>>, vector<8x54xf32>
    %1 = arith.truncf %0 : vector<8x54xf32> to vector<8x54xbf16>
    %c0_1 = arith.constant 0 : index
    %c0_2 = arith.constant 0 : index
    %2 = vector.load %arg2[%c0_1, %c0_2] : memref<54x128xbf16, #tpu.memory_space<vmem>>, vector<54x128xbf16>
    %cst = arith.constant dense<0.000000e+00> : vector<8x128xf32>
    %3 = tpu.matmul %1, %2, %cst {dimension_numbers = #tpu.dot_dimension_numbers<[1], [0], [0], [1], [0, 0, 1, 1], [], []>} : vector<8x54xbf16>, vector<54x128xbf16>, vector<8x128xf32> -> vector<8x128xf32>
    %c0_3 = arith.constant 0 : index
    %c0_4 = arith.constant 0 : index
    %4 = vector.load %arg3[%c0_3, %c0_4] : memref<1x128xf32, #tpu.memory_space<vmem>>, vector<1x128xf32>
    %5 = vector.broadcast %4 : vector<1x128xf32> to vector<8x128xf32>
    %6 = arith.addf %3, %5 : vector<8x128xf32>
    %cst_5 = arith.constant 0.000000e+00 : f32
    %7 = vector.broadcast %cst_5 : f32 to vector<8x128xf32>
    %8 = arith.maximumf %6, %7 : vector<8x128xf32>
    %9 = arith.truncf %8 : vector<8x128xf32> to vector<8x128xbf16>
    %c0_6 = arith.constant 0 : index
    %c0_7 = arith.constant 0 : index
    %10 = vector.load %arg4[%c0_6, %c0_7] : memref<128x128xbf16, #tpu.memory_space<vmem>>, vector<128x128xbf16>
    %cst_8 = arith.constant dense<0.000000e+00> : vector<8x128xf32>
    %11 = tpu.matmul %9, %10, %cst_8 {dimension_numbers = #tpu.dot_dimension_numbers<[1], [0], [0], [1], [0, 0, 1, 1], [], []>} : vector<8x128xbf16>, vector<128x128xbf16>, vector<8x128xf32> -> vector<8x128xf32>
    %c0_9 = arith.constant 0 : index
    %c0_10 = arith.constant 0 : index
    %12 = vector.load %arg5[%c0_9, %c0_10] : memref<1x128xf32, #tpu.memory_space<vmem>>, vector<1x128xf32>
    %13 = vector.broadcast %12 : vector<1x128xf32> to vector<8x128xf32>
    %14 = arith.addf %11, %13 : vector<8x128xf32>
    %15 = arith.truncf %14 : vector<8x128xf32> to vector<8x128xbf16>
    %c0_11 = arith.constant 0 : index
    %c0_12 = arith.constant 0 : index
    %16 = vector.load %arg6[%c0_11, %c0_12] : memref<8x128xbf16, #tpu.memory_space<vmem>>, vector<8x128xbf16>
    tpu.vector_store %arg6[%c0_11, %c0_12], %15 {strides = array<i32>} : memref<8x128xbf16, #tpu.memory_space<vmem>>, vector<8x128xbf16>,
    return
  }
  func.func @transform_0(%arg0: i32) -> (i32, i32) {
    %c0_i32 = arith.constant 0 : i32
    %c0_i32_0 = arith.constant 0 : i32
    return %arg0, %c0_i32 : i32, i32
  }
  func.func @transform_1(%arg0: i32) -> (i32, i32) {
    %c0_i32 = arith.constant 0 : i32
    %c0_i32_0 = arith.constant 0 : i32
    %c0_i32_1 = arith.constant 0 : i32
    return %c0_i32, %c0_i32_0 : i32, i32
  }
  func.func @transform_2(%arg0: i32) -> (i32, i32) {
    %c0_i32 = arith.constant 0 : i32
    %c0_i32_0 = arith.constant 0 : i32
    %c0_i32_1 = arith.constant 0 : i32
    return %c0_i32, %c0_i32_0 : i32, i32
  }
  func.func @transform_3(%arg0: i32) -> (i32, i32) {
    %c0_i32 = arith.constant 0 : i32
    %c0_i32_0 = arith.constant 0 : i32
    %c0_i32_1 = arith.constant 0 : i32
    return %c0_i32, %c0_i32_0 : i32, i32
  }
  func.func @transform_4(%arg0: i32) -> (i32, i32) {
    %c0_i32 = arith.constant 0 : i32
    %c0_i32_0 = arith.constant 0 : i32
    %c0_i32_1 = arith.constant 0 : i32
    return %c0_i32, %c0_i32_0 : i32, i32
  }
  func.func @transform_5(%arg0: i32) -> (i32, i32) {
    %c0_i32 = arith.constant 0 : i32
    %c0_i32_0 = arith.constant 0 : i32
    return %arg0, %c0_i32 : i32, i32
  }
}

</mosaic_0001>

<llo_original>
// kernel: fc_dynamics_reward.1
$region0: #{fc_dynamics_reward.1}
  #allocation0 [shape = 'u32[]', space=smem, size = 0x4, offset = 0x4, fixed_abs, tag = 'smem constant byte address 0x4 - core index']
  #allocation1 [shape = 'u32[72,128]{1,0:T(1,128)}', space=vmem, size = 0x9000, scoped, tag = 'internal scratch']
  %s0 = inlined_call_operand.hbm [shape: f32[8,54], index: 0, kind: input, shape index: {}]
  %s1 = inlined_call_operand.hbm [shape: bf16[54,128], index: 1, kind: input, shape index: {}]
  %s2 = inlined_call_operand.vmem [shape: f32[1,128], index: 2, kind: input, shape index: {}]
  %s3 = inlined_call_operand.hbm [shape: bf16[128,128], index: 3, kind: input, shape index: {}]
  %s4 = inlined_call_operand.vmem [shape: f32[1,128], index: 4, kind: input, shape index: {}]
  %s5 = inlined_call_operand.hbm [shape: bf16[8,128], index: 5, kind: output, shape index: {}]
  %s6 = sld [smem:[#allocation0]]
  $region42: #{fc_dynamics_reward.1} parent=0
    _
  %s8 = ssub.s32 1, %s6
  %s9 = scalar_select 0, %s8, %s6
  $region1: #{fc_dynamics_reward.1} parent=0
    #allocation2 [shape = 'u8[4096]{0}', space=vmem, size = 0x1000, scoped, tag = 'input window, operand 0, single buffered']
    #allocation3 [shape = 's32[1]{0}', space=sflag, size = 0x4, scoped, tag = 'scoped memory for fc_dynamics_reward.1']
    #allocation4 [shape = 's32[1]{0}', space=sflag, size = 0x4, scoped, tag = 'scoped memory for fc_dynamics_reward.1']
    #allocation5 [shape = 'u8[14336]{0}', space=vmem, size = 0x3800, scoped, tag = 'input window, operand 1, single buffered']
    #allocation6 [shape = 's32[1]{0}', space=sflag, size = 0x4, scoped, tag = 'scoped memory for fc_dynamics_reward.1']
    #allocation7 [shape = 'u8[32768]{0}', space=vmem, size = 0x8000, scoped, tag = 'input window, operand 3, single buffered']
    #allocation8 [shape = 'u8[2048]{0}', space=vmem, size = 0x800, scoped, tag = 'output window, operand 0, single buffered']
    %10 = vsyncpa [#allocation3], 0
    %11 = vsyncpa [#allocation6], 0
    %12 = vsyncpa [#allocation4], 0
    // Predicated region
    $region2: #{fc_dynamics_reward.1} parent=1 // pred_check
      _
    $region3: #{fc_dynamics_reward.1} parent=1 // pred_check_branch
      %14 = sbr.rel (0) target = $region5
    $region4: #{fc_dynamics_reward.1} parent=1 // pred_region
      %16 = vsyncadd [#allocation3], 0
      %s18 = sshll.u32 %s0, 4
      %s19 = int_to_ptr.hbm [resolvable:$true] %s18
      %s20 = sshll.u32 [#allocation2], 4
      %s21 = int_to_ptr.vmem [resolvable:$true] %s20
      %23 = dma.hbm_to_vmem [thread:$0]  %s19, 128, %s21, [#allocation3]
    $region5: #{fc_dynamics_reward.1} parent=1 // pred_fallthru
      _
    // Predicated region
    $region6: #{fc_dynamics_reward.1} parent=1 // pred_check
      _
    $region7: #{fc_dynamics_reward.1} parent=1 // pred_check_branch
      %25 = sbr.rel (0) target = $region9
    $region8: #{fc_dynamics_reward.1} parent=1 // pred_region
      %27 = vsyncadd [#allocation6], 0
      %s28 = sshll.u32 %s1, 4
      %s29 = int_to_ptr.hbm [resolvable:$true] %s28
      %s30 = sshll.u32 [#allocation5], 4
      %s31 = int_to_ptr.vmem [resolvable:$true] %s30
      %36 = dma.hbm_to_vmem [thread:$0]  %s29, 448, %s31, [#allocation6], 64, 64, 4
    $region9: #{fc_dynamics_reward.1} parent=1 // pred_fallthru
      _
    // Predicated region
    $region10: #{fc_dynamics_reward.1} parent=1 // pred_check
      _
    $region11: #{fc_dynamics_reward.1} parent=1 // pred_check_branch
      %38 = sbr.rel (0) target = $region13
    $region12: #{fc_dynamics_reward.1} parent=1 // pred_region
      _
    $region13: #{fc_dynamics_reward.1} parent=1 // pred_fallthru
      _
    // Predicated region
    $region14: #{fc_dynamics_reward.1} parent=1 // pred_check
      _
    $region15: #{fc_dynamics_reward.1} parent=1 // pred_check_branch
      %40 = sbr.rel (0) target = $region17
    $region16: #{fc_dynamics_reward.1} parent=1 // pred_region
      %42 = vsyncadd [#allocation6], 0
      %s43 = sshll.u32 %s3, 4
      %s44 = int_to_ptr.hbm [resolvable:$true] %s43
      %s45 = sshll.u32 [#allocation7], 4
      %s46 = int_to_ptr.vmem [resolvable:$true] %s45
      %51 = dma.hbm_to_vmem [thread:$0]  %s44, 1024, %s46, [#allocation6], 64, 64, 4
    $region17: #{fc_dynamics_reward.1} parent=1 // pred_fallthru
      _
    // Predicated region
    $region18: #{fc_dynamics_reward.1} parent=1 // pred_check
      _
    $region19: #{fc_dynamics_reward.1} parent=1 // pred_check_branch
      %53 = sbr.rel (0) target = $region21
    $region20: #{fc_dynamics_reward.1} parent=1 // pred_region
      _
    $region21: #{fc_dynamics_reward.1} parent=1 // pred_fallthru
      _
    // Predicated region
    $region22: #{fc_dynamics_reward.1} parent=1 // pred_check
      _
    $region23: #{fc_dynamics_reward.1} parent=1 // pred_check_branch
      %55 = sbr.rel (0) target = $region25
    $region24: #{fc_dynamics_reward.1} parent=1 // pred_region
      %57 = dma.done [#allocation3], 128
    $region25: #{fc_dynamics_reward.1} parent=1 // pred_fallthru
      _
    // Predicated region
    $region26: #{fc_dynamics_reward.1} parent=1 // pred_check
      _
    $region27: #{fc_dynamics_reward.1} parent=1 // pred_check_branch
      %59 = sbr.rel (0) target = $region29
    $region28: #{fc_dynamics_reward.1} parent=1 // pred_region
      %61 = dma.done [#allocation6], 448
    $region29: #{fc_dynamics_reward.1} parent=1 // pred_fallthru
      _
    // Predicated region
    $region30: #{fc_dynamics_reward.1} parent=1 // pred_check
      _
    $region31: #{fc_dynamics_reward.1} parent=1 // pred_check_branch
      %63 = sbr.rel (0) target = $region33
    $region32: #{fc_dynamics_reward.1} parent=1 // pred_region
      %65 = dma.done [#allocation6], 1024
    $region33: #{fc_dynamics_reward.1} parent=1 // pred_fallthru
      _
    %v67 = vld [vmem:[#allocation2] sm:$0xff]
    %v68 = vpack.c.bf16 %v67, %v67
    %v69 = vld [vmem:[#allocation5] sm:$0xf]
    %v70 = vld [vmem:[#allocation5 + $0x4] sm:$0xf]
    %v71 = vld [vmem:[#allocation5 + $0x8] sm:$0xf]
    %v72 = vld [vmem:[#allocation5 + $0xc] sm:$0xf]
    %v73 = vld [vmem:[#allocation5 + $0x10] sm:$0xf]
    %v74 = vld [vmem:[#allocation5 + $0x14] sm:$0xf]
    %v75 = vld [vmem:[#allocation5 + $0x18] sm:$0x7]
    %v76 = vld [vmem:[%s2] sm:$0x1]
    %v78 = vperm.slane %v76, 0
    %v87 = vunpack.c.l.b16 %v69
    %v88 = vunpack.c.l.b16 %v70
    %v89 = vunpack.c.l.b16 %v71
    %v90 = vunpack.c.l.b16 %v72
    %v91 = vunpack.c.l.b16 %v73
    %v92 = vunpack.c.l.b16 %v74
    %v93 = vunpack.c.l.b16 %v75
    %v94 = vpack.c.b16 %v88, %v87
    %v95 = vpack.c.b16 %v90, %v89
    %v96 = vpack.c.b16 %v92, %v91
    %v97 = vpack.c.b16 %v93, %v93
    %vm101 = vcmask 441344
    %v103 = vsel %vm101, %v68, 0
    %vm105 = vcmask 1042432
    %v107 = vsel %vm105, %v97, 0
    %109 = vmatpush.bf16.msra.mxu0 0
    %110 = vmatpush.bf16.msra.mxu0 0
    %111 = vmatpush.bf16.msra.mxu0 0
    %112 = vmatpush.bf16.msra.mxu0 0
    %113 = vmatpush.bf16.msra.mxu0 %v107
    %114 = vmatpush.bf16.msra.mxu0 %v96
    %115 = vmatpush.bf16.msra.mxu0 %v95
    %116 = vmatpush.bf16.msra.mxu0 %v94
    %117 = vmatmul.bf16.gmra.mxu0 %v103
    %v118 = vpop.f32.mrf.mxu0
    %v119 = vadd.f32 %v78, %v118
    %v120 = vpop.f32.mrf.mxu0
    %121 = vdwg.mxu0
    %v122 = vmax.f32 %v119, 0.0
    %v123 = vpack.c.bf16 %v122, %v122
    %v124 = vld [vmem:[#allocation7] sm:$0xf]
    %v125 = vld [vmem:[#allocation7 + $0x4] sm:$0xf]
    %v126 = vld [vmem:[#allocation7 + $0x8] sm:$0xf]
    %v127 = vld [vmem:[#allocation7 + $0xc] sm:$0xf]
    %v128 = vld [vmem:[#allocation7 + $0x10] sm:$0xf]
    %v129 = vld [vmem:[#allocation7 + $0x14] sm:$0xf]
    %v130 = vld [vmem:[#allocation7 + $0x18] sm:$0xf]
    %v131 = vld [vmem:[#allocation7 + $0x1c] sm:$0xf]
    %v132 = vld [vmem:[#allocation7 + $0x20] sm:$0xf]
    %v133 = vld [vmem:[#allocation7 + $0x24] sm:$0xf]
    %v134 = vld [vmem:[#allocation7 + $0x28] sm:$0xf]
    %v135 = vld [vmem:[#allocation7 + $0x2c] sm:$0xf]
    %v136 = vld [vmem:[#allocation7 + $0x30] sm:$0xf]
    %v137 = vld [vmem:[#allocation7 + $0x34] sm:$0xf]
    %v138 = vld [vmem:[#allocation7 + $0x38] sm:$0xf]
    %v139 = vld [vmem:[#allocation7 + $0x3c] sm:$0xf]
    %v140 = vld [vmem:[%s4] sm:$0x1]
    %v142 = vperm.slane %v140, 0
    %v160 = vunpack.c.l.b16 %v124
    %v161 = vunpack.c.l.b16 %v125
    %v162 = vunpack.c.l.b16 %v126
    %v163 = vunpack.c.l.b16 %v127
    %v164 = vunpack.c.l.b16 %v128
    %v165 = vunpack.c.l.b16 %v129
    %v166 = vunpack.c.l.b16 %v130
    %v167 = vunpack.c.l.b16 %v131
    %v168 = vunpack.c.l.b16 %v132
    %v169 = vunpack.c.l.b16 %v133
    %v170 = vunpack.c.l.b16 %v134
    %v171 = vunpack.c.l.b16 %v135
    %v172 = vunpack.c.l.b16 %v136
    %v173 = vunpack.c.l.b16 %v137
    %v174 = vunpack.c.l.b16 %v138
    %v175 = vunpack.c.l.b16 %v139
    %v176 = vpack.c.b16 %v161, %v160
    %v177 = vpack.c.b16 %v163, %v162
    %v178 = vpack.c.b16 %v165, %v164
    %v179 = vpack.c.b16 %v167, %v166
    %v180 = vpack.c.b16 %v169, %v168
    %v181 = vpack.c.b16 %v171, %v170
    %v182 = vpack.c.b16 %v173, %v172
    %v183 = vpack.c.b16 %v175, %v174
    %192 = vmatpush.bf16.msra.mxu0 %v183
    %193 = vmatpush.bf16.msra.mxu0 %v182
    %194 = vmatpush.bf16.msra.mxu0 %v181
    %195 = vmatpush.bf16.msra.mxu0 %v180
    %196 = vmatpush.bf16.msra.mxu0 %v179
    %197 = vmatpush.bf16.msra.mxu0 %v178
    %198 = vmatpush.bf16.msra.mxu0 %v177
    %199 = vmatpush.bf16.msra.mxu0 %v176
    %200 = vmatmul.bf16.gmra.mxu0 %v123
    %v201 = vpop.f32.mrf.mxu0
    %v202 = vadd.f32 %v142, %v201
    %v203 = vpop.f32.mrf.mxu0
    %204 = vdwg.mxu0
    %v205 = vpack.c.bf16 %v202, %v202
    %206 = vst [vmem:[#allocation8] sm:$0xf] %v205
    // Predicated region
    $region34: #{fc_dynamics_reward.1} parent=1 // pred_check
      _
    $region35: #{fc_dynamics_reward.1} parent=1 // pred_check_branch
      %208 = sbr.rel (0) target = $region37
    $region36: #{fc_dynamics_reward.1} parent=1 // pred_region
      %210 = vsyncadd [#allocation4], 0
      %s212 = sshll.u32 [#allocation8], 4
      %s213 = int_to_ptr.vmem [resolvable:$true] %s212
      %s214 = sshll.u32 %s5, 4
      %s215 = int_to_ptr.hbm [resolvable:$true] %s214
      %217 = dma.vmem_to_hbm [thread:$0]  %s213, 64, %s215, [#allocation4]
    $region37: #{fc_dynamics_reward.1} parent=1 // pred_fallthru
      _
    // Predicated region
    $region38: #{fc_dynamics_reward.1} parent=1 // pred_check
      _
    $region39: #{fc_dynamics_reward.1} parent=1 // pred_check_branch
      %219 = sbr.rel (0) target = $region41
    $region40: #{fc_dynamics_reward.1} parent=1 // pred_region
      %221 = dma.done [#allocation4], 64
    $region41: #{fc_dynamics_reward.1} parent=1 // pred_fallthru
      _
    %222 = vsyncpa [#allocation3], 1
    %223 = vsyncpa [#allocation6], 1
    %224 = vsyncpa [#allocation4], 1

</llo_original>
